<compile_context>
chip_gen: v6e
topology: v6e:2x2x1
jax: 0.10.0
libtpu: 0.0.40
codegen_flags: <defaults>
</compile_context>

<pallas_src>
import jax
import jax.numpy as jnp
from jax.experimental import pallas as pl
from jax.experimental.pallas import tpu as pltpu

F_IN = 42      # 21 hand keypoints x 2 coords
H = 64         # hidden width
SMALL_BATCH_CUTOFF = 512
MAX_TB = 8192


def _round_up(n, m):
    return ((n + m - 1) // m) * m


def _choose_tb(B):
    """Batch tile: multiple of 256, <= MAX_TB, >= 2 grid steps when possible."""
    b_al = _round_up(max(B, 1), 256)
    if b_al >= 512:
        tb = _round_up((b_al + 1) // 2, 256)   # at least two steps (v7x: 2 TCs)
    else:
        tb = b_al
    return min(tb, MAX_TB)


def _mlp_kernel(x_ref, w1_ref, b1_ref, w2_ref, b2_ref, w3_ref, b3_ref, o_ref):
    # x_ref : [TB, F_IN] f32 (batch on sublanes of the streamed input tile)
    # w1_ref: [H, F_IN]  f32   b1_ref: [H, 1] f32
    # w2_ref: [H, H]     f32   b2_ref: [H, 1] f32
    # w3_ref: [H, 1]     f32   b3_ref: [1]    f32 (SMEM scalar)
    # o_ref : [1, TB]    f32 (batch on lanes -> lane-dense unmasked stores)
    x = x_ref[...]

    # fc1: contract the 42-feature axis of both operands -> [H, TB]
    # (same NT form as q @ k^T in flash attention; keeps batch on lanes).
    h1 = jax.lax.dot_general(
        w1_ref[...], x, (((1,), (1,)), ((), ())),
        preferred_element_type=jnp.float32)
    h1 = jnp.maximum(h1 + b1_ref[...], 0.0)

    # fc2: [H,H] @ [H,TB] -> [H,TB]
    h2 = jnp.dot(w2_ref[...], h1, preferred_element_type=jnp.float32)
    h2 = jnp.maximum(h2 + b2_ref[...], 0.0)

    # fc3: width-1 output -> VPU multiply + sublane (XLU) reduce; the kernel
    # is HBM-bound so this vs an M=1 MXU matmul makes no measurable difference.
    logits = jnp.sum(h2 * w3_ref[...], axis=0, keepdims=True) + b3_ref[0]
    o_ref[...] = jax.nn.sigmoid(logits)


def _xla_forward(x, kparams):
    """Fused plain-XLA path for small batches (avoids tile-padding overhead)."""
    w1, b1, w2, b2, w3, b3 = kparams
    x = x.reshape(x.shape[0], -1).astype(jnp.float32)
    h = jnp.maximum(x @ w1.T + b1[:, 0], 0.0)
    h = jnp.maximum(h @ w2.T + b2[:, 0], 0.0)
    return jax.nn.sigmoid(h @ w3 + b3)


def hand_gesture_forward(x, kparams, *, tb=None, force_kernel=False):
    """x: [B, ...] (flattened to [B, 42]). Returns [B, 1] f32."""
    B = x.shape[0]
    if B < SMALL_BATCH_CUTOFF and not force_kernel:
        return _xla_forward(x, kparams)

    w1, b1, w2, b2, w3, b3 = kparams

    x = x.reshape(B, -1)                     # nn.Flatten (metadata-only)
    assert x.shape[1] == F_IN
    if x.dtype != jnp.float32:
        x = x.astype(jnp.float32)

    if tb is None:
        tb = _choose_tb(B)
    else:
        tb = min(_round_up(tb, 128), MAX_TB)

    b_pad = _round_up(B, tb)
    grid = (b_pad // tb,)
    if b_pad != B:                           # pad batch rows only (ragged case)
        x = jnp.pad(x, ((0, b_pad - B), (0, 0)))

    flops = 2 * b_pad * (F_IN * H + H * H + H)
    bytes_accessed = b_pad * (F_IN * 4 + 4) + 4 * (H * F_IN + H * H + 3 * H + 1)
    cost = pl.CostEstimate(flops=flops, transcendentals=b_pad,
                           bytes_accessed=bytes_accessed)

    out = pl.pallas_call(
        _mlp_kernel,
        out_shape=jax.ShapeDtypeStruct((1, b_pad), jnp.float32),
        grid_spec=pltpu.PrefetchScalarGridSpec(
            num_scalar_prefetch=0,
            grid=grid,
            in_specs=[
                pl.BlockSpec((tb, F_IN), lambda i: (i, 0)),      # x tile (streamed)
                pl.BlockSpec((H, F_IN), lambda i: (0, 0)),       # w1 (resident)
                pl.BlockSpec((H, 1), lambda i: (0, 0)),          # b1
                pl.BlockSpec((H, H), lambda i: (0, 0)),          # w2
                pl.BlockSpec((H, 1), lambda i: (0, 0)),          # b2
                pl.BlockSpec((H, 1), lambda i: (0, 0)),          # w3
                pl.BlockSpec(memory_space=pltpu.MemorySpace.SMEM),  # b3 scalar
            ],
            out_specs=pl.BlockSpec((1, tb), lambda i: (0, i)),
        ),
        compiler_params=pltpu.CompilerParams(
            dimension_semantics=("parallel",),
            vmem_limit_bytes=32 * 1024 * 1024),
        cost_estimate=cost,
    )(x, w1, b1, w2, b2, w3, b3)

    return out[0, :B].reshape(B, 1)


def init_params(key):
    """Raw params matching PyTorch nn.Linear layout ([out, in] weights), f32."""
    ks = jax.random.split(key, 6)

    def uniform(k, shape, fan_in):
        bound = 1.0 / jnp.sqrt(fan_in)
        return jax.random.uniform(k, shape, jnp.float32, -bound, bound)

    w1 = uniform(ks[0], (H, F_IN), 42.0)
    b1 = uniform(ks[1], (H,), 42.0)
    w2 = uniform(ks[2], (H, H), 64.0)
    b2 = uniform(ks[3], (H,), 64.0)
    w3 = uniform(ks[4], (1, H), 64.0)
    b3 = uniform(ks[5], (1,), 64.0)
    return (w1, b1, w2, b2, w3, b3)


def prepare_params(raw):
    """Convert raw PyTorch-layout f32 params into kernel layout (once)."""
    w1, b1, w2, b2, w3, b3 = raw
    return (
        w1.astype(jnp.float32),                  # [H, F_IN]
        b1.reshape(H, 1).astype(jnp.float32),    # [H, 1]
        w2.astype(jnp.float32),                  # [H, H]
        b2.reshape(H, 1).astype(jnp.float32),    # [H, 1]
        w3.reshape(H, 1).astype(jnp.float32),    # [H, 1] ([1,H] transposed)
        b3.reshape(1).astype(jnp.float32),       # [1] (SMEM scalar)
    )


def reference_forward(x, raw):
    """Pure-JAX f32 reference with the original module semantics (eval mode)."""
    w1, b1, w2, b2, w3, b3 = raw
    x = x.reshape(x.shape[0], -1)
    h = jnp.maximum(x @ w1.T + b1, 0.0)
    h = jnp.maximum(h @ w2.T + b2, 0.0)
    return jax.nn.sigmoid(h @ w3.T + b3)


if __name__ == "__main__":
    key = jax.random.PRNGKey(0)
    kx, kx2, kx3, kp = jax.random.split(key, 4)

    raw = init_params(kp)
    kparams = prepare_params(raw)

    # Small batch: dispatches to the fused XLA path (no tile-padding overhead).
    B = 8
    x = jax.random.normal(kx, (B, 21, 2), jnp.float32)
    out = jax.block_until_ready(hand_gesture_forward(x, kparams))
    ref = reference_forward(x, raw)
    assert out.shape == (B, 1), out.shape
    assert jnp.allclose(out, ref, atol=2e-2, rtol=2e-2), "mismatch (B=8, XLA path)"

    # Kernel path, tile-aligned batch: 2 grid steps, no padding.
    B2 = 1024
    x2 = jax.random.normal(kx2, (B2, 21, 2), jnp.float32)
    out2 = jax.block_until_ready(hand_gesture_forward(x2, kparams, force_kernel=True))
    ref2 = reference_forward(x2, raw)
    assert out2.shape == (B2, 1), out2.shape
    assert jnp.allclose(out2, ref2, atol=2e-2, rtol=2e-2), "mismatch (B=1024, kernel)"

    # Kernel path, ragged batch: exercises batch padding + multi-step grid.
    B3 = 600
    x3 = jax.random.normal(kx3, (B3, 21, 2), jnp.float32)
    out3 = jax.block_until_ready(hand_gesture_forward(x3, kparams, force_kernel=True))
    ref3 = reference_forward(x3, raw)
    assert out3.shape == (B3, 1), out3.shape
    assert jnp.allclose(out3, ref3, atol=2e-2, rtol=2e-2), "mismatch (B=600, kernel)"

    print("KERNEL_OK")
</pallas_src>

<mosaic_0001>
module attributes {stable_mosaic.version = 11 : i64} {
  func.func @_mlp_kernel(%arg0: i32, %arg1: memref<512x42xf32, #tpu.memory_space<vmem>>, %arg2: memref<64x42xf32, #tpu.memory_space<vmem>>, %arg3: memref<64x1xf32, #tpu.memory_space<vmem>>, %arg4: memref<64x64xf32, #tpu.memory_space<vmem>>, %arg5: memref<64x1xf32, #tpu.memory_space<vmem>>, %arg6: memref<64x1xf32, #tpu.memory_space<vmem>>, %arg7: memref<1xf32, #tpu.memory_space<smem>>, %arg8: memref<1x512xf32, #tpu.memory_space<vmem>>) attributes {dimension_semantics = [#tpu.dimension_semantics<parallel>], iteration_bounds = array<i64: 2>, scalar_prefetch = 0 : i64, scratch_operands = 0 : i64, tpu.core_type = #tpu.core_type<tc>, window_params = [{transform_indices = @transform_0, window_bounds = array<i64: 512, 42>}, {pipeline_mode = #tpu.pipeline_mode<synchronous>, transform_indices = @transform_1, window_bounds = array<i64: 64, 42>}, {pipeline_mode = #tpu.pipeline_mode<synchronous>, transform_indices = @transform_2, window_bounds = array<i64: 64, 1>}, {pipeline_mode = #tpu.pipeline_mode<synchronous>, transform_indices = @transform_3, window_bounds = array<i64: 64, 64>}, {pipeline_mode = #tpu.pipeline_mode<synchronous>, transform_indices = @transform_4, window_bounds = array<i64: 64, 1>}, {pipeline_mode = #tpu.pipeline_mode<synchronous>, transform_indices = @transform_5, window_bounds = array<i64: 64, 1>}, {transform_indices = @transform_6, window_bounds = array<i64: 1>}, {transform_indices = @transform_7, window_bounds = array<i64: 1, 512>}]} {
    %c0 = arith.constant 0 : index
    %c0_0 = arith.constant 0 : index
    %0 = vector.load %arg1[%c0, %c0_0] : memref<512x42xf32, #tpu.memory_space<vmem>>, vector<512x42xf32>
    %c0_1 = arith.constant 0 : index
    %c0_2 = arith.constant 0 : index
    %1 = vector.load %arg2[%c0_1, %c0_2] : memref<64x42xf32, #tpu.memory_space<vmem>>, vector<64x42xf32>
    %cst = arith.constant dense<0.000000e+00> : vector<64x512xf32>
    %2 = tpu.matmul %1, %0, %cst {dimension_numbers = #tpu.dot_dimension_numbers<[1], [1], [0], [0], [0, 0, 1, 0], [], []>} : vector<64x42xf32>, vector<512x42xf32>, vector<64x512xf32> -> vector<64x512xf32>
    %c0_3 = arith.constant 0 : index
    %c0_4 = arith.constant 0 : index
    %3 = vector.load %arg3[%c0_3, %c0_4] : memref<64x1xf32, #tpu.memory_space<vmem>>, vector<64x1xf32>
    %4 = vector.broadcast %3 : vector<64x1xf32> to vector<64x512xf32>
    %5 = arith.addf %2, %4 : vector<64x512xf32>
    %cst_5 = arith.constant 0.000000e+00 : f32
    %6 = vector.broadcast %cst_5 : f32 to vector<64x512xf32>
    %7 = arith.maximumf %5, %6 : vector<64x512xf32>
    %c0_6 = arith.constant 0 : index
    %c0_7 = arith.constant 0 : index
    %8 = vector.load %arg4[%c0_6, %c0_7] : memref<64x64xf32, #tpu.memory_space<vmem>>, vector<64x64xf32>
    %cst_8 = arith.constant dense<0.000000e+00> : vector<64x512xf32>
    %9 = tpu.matmul %8, %7, %cst_8 {dimension_numbers = #tpu.dot_dimension_numbers<[1], [0], [0], [1], [0, 0, 1, 1], [], []>} : vector<64x64xf32>, vector<64x512xf32>, vector<64x512xf32> -> vector<64x512xf32>
    %c0_9 = arith.constant 0 : index
    %c0_10 = arith.constant 0 : index
    %10 = vector.load %arg5[%c0_9, %c0_10] : memref<64x1xf32, #tpu.memory_space<vmem>>, vector<64x1xf32>
    %11 = vector.broadcast %10 : vector<64x1xf32> to vector<64x512xf32>
    %12 = arith.addf %9, %11 : vector<64x512xf32>
    %cst_11 = arith.constant 0.000000e+00 : f32
    %13 = vector.broadcast %cst_11 : f32 to vector<64x512xf32>
    %14 = arith.maximumf %12, %13 : vector<64x512xf32>
    %c0_12 = arith.constant 0 : index
    %c0_13 = arith.constant 0 : index
    %15 = vector.load %arg6[%c0_12, %c0_13] : memref<64x1xf32, #tpu.memory_space<vmem>>, vector<64x1xf32>
    %16 = vector.broadcast %15 : vector<64x1xf32> to vector<64x512xf32>
    %17 = arith.mulf %14, %16 : vector<64x512xf32>
    %cst_14 = arith.constant dense<0.000000e+00> : vector<512xf32>
    %18 = vector.multi_reduction <add>, %17, %cst_14 [0] : vector<64x512xf32> to vector<512xf32>
    %19 = vector.shape_cast %18 : vector<512xf32> to vector<1x512xf32>
    %c0_15 = arith.constant 0 : index
    %20 = memref.load %arg7[%c0_15] : memref<1xf32, #tpu.memory_space<smem>>
    %21 = vector.broadcast %20 : f32 to vector<1x512xf32>
    %22 = arith.addf %19, %21 : vector<1x512xf32>
    %23 = arith.negf %22 : vector<1x512xf32>
    %24 = math.exp %23 : vector<1x512xf32>
    %cst_16 = arith.constant 1.000000e+00 : f32
    %25 = vector.broadcast %cst_16 : f32 to vector<1x512xf32>
    %26 = arith.addf %25, %24 : vector<1x512xf32>
    %27 = arith.divf %25, %26 : vector<1x512xf32>
    %c0_17 = arith.constant 0 : index
    %c0_18 = arith.constant 0 : index
    %28 = vector.load %arg8[%c0_17, %c0_18] : memref<1x512xf32, #tpu.memory_space<vmem>>, vector<1x512xf32>
    tpu.vector_store %arg8[%c0_17, %c0_18], %27 {strides = array<i32>} : memref<1x512xf32, #tpu.memory_space<vmem>>, vector<1x512xf32>,
    return
  }
  func.func @transform_0(%arg0: i32) -> (i32, i32) {
    %c0_i32 = arith.constant 0 : i32
    %c0_i32_0 = arith.constant 0 : i32
    return %arg0, %c0_i32 : i32, i32
  }
  func.func @transform_1(%arg0: i32) -> (i32, i32) {
    %c0_i32 = arith.constant 0 : i32
    %c0_i32_0 = arith.constant 0 : i32
    %c0_i32_1 = arith.constant 0 : i32
    return %c0_i32, %c0_i32_0 : i32, i32
  }
  func.func @transform_2(%arg0: i32) -> (i32, i32) {
    %c0_i32 = arith.constant 0 : i32
    %c0_i32_0 = arith.constant 0 : i32
    %c0_i32_1 = arith.constant 0 : i32
    return %c0_i32, %c0_i32_0 : i32, i32
  }
  func.func @transform_3(%arg0: i32) -> (i32, i32) {
    %c0_i32 = arith.constant 0 : i32
    %c0_i32_0 = arith.constant 0 : i32
    %c0_i32_1 = arith.constant 0 : i32
    return %c0_i32, %c0_i32_0 : i32, i32
  }
  func.func @transform_4(%arg0: i32) -> (i32, i32) {
    %c0_i32 = arith.constant 0 : i32
    %c0_i32_0 = arith.constant 0 : i32
    %c0_i32_1 = arith.constant 0 : i32
    return %c0_i32, %c0_i32_0 : i32, i32
  }
  func.func @transform_5(%arg0: i32) -> (i32, i32) {
    %c0_i32 = arith.constant 0 : i32
    %c0_i32_0 = arith.constant 0 : i32
    %c0_i32_1 = arith.constant 0 : i32
    return %c0_i32, %c0_i32_0 : i32, i32
  }
  func.func @transform_6(%arg0: i32) -> i32 {
    %c0_i32 = arith.constant 0 : i32
    %c0_i32_0 = arith.constant 0 : i32
    return %c0_i32 : i32
  }
  func.func @transform_7(%arg0: i32) -> (i32, i32) {
    %c0_i32 = arith.constant 0 : i32
    %c0_i32_0 = arith.constant 0 : i32
    return %c0_i32, %arg0 : i32, i32
  }
}

</mosaic_0001>

<llo_original>
// kernel: tpu_custom_call.1
$region0: #{tpu_custom_call.1}
  #allocation0 [shape = 'u32[]', space=smem, size = 0x4, offset = 0x4, fixed_abs, tag = 'smem constant byte address 0x4 - core index']
  #allocation1 [shape = 'u32[144,128]{1,0:T(1,128)}', space=vmem, size = 0x12000, scoped, tag = 'internal scratch']
  #allocation2 [shape = 'f32[1]{0:T(128)S(6)}', space=smem, size = 0x200, scoped, tag = 'scoped memory for tpu_custom_call.1']
  %s0 = inlined_call_operand.vmem [shape: f32[1024,42], index: 0, kind: input, shape index: {}]
  %s1 = inlined_call_operand.vmem [shape: f32[64,42], index: 1, kind: input, shape index: {}]
  %s2 = inlined_call_operand.vmem [shape: f32[64,1], index: 2, kind: input, shape index: {}]
  %s3 = inlined_call_operand.vmem [shape: f32[64,64], index: 3, kind: input, shape index: {}]
  %s4 = inlined_call_operand.vmem [shape: f32[64,1], index: 4, kind: input, shape index: {}]
  %s5 = inlined_call_operand.vmem [shape: f32[64,1], index: 5, kind: input, shape index: {}]
  %s6 = inlined_call_operand.<no memory space> [shape: f32[1], index: 6, kind: input, shape index: {}]
  %s7 = inlined_call_operand.hbm [shape: f32[1,1024], index: 7, kind: output, shape index: {}]
  %s8 = sld [smem:[#allocation0]]
  $region61: #{tpu_custom_call.1} parent=0
    _
  %s10 = ssub.s32 1, %s8
  %s11 = scalar_select 0, %s10, %s8
  %12 = sst [smem:[#allocation2]] %s6
  $region1: #{tpu_custom_call.1} parent=0
    #allocation3 [shape = 'u8[4096]{0}', space=vmem, size = 0x1000, scoped, tag = 'output window, operand 0']
    #allocation4 [shape = 's32[2]{0}', space=sflag, size = 0x8, scoped, tag = 'scoped memory for tpu_custom_call.1']
    %13 = vsyncpa [#allocation4], 0
    %s14 = scalar_lea.sflag [#allocation4], 1
    %15 = vsyncpa %s14, 0
    loop: start=0, step=1, limit=4
    $region2: #{tpu_custom_call.1} parent=1 // loop_pre_header
      _
    $region3: #{tpu_custom_call.1} parent=1 // loop_header
      %s17 = sphi 0, %s21
      %p18 = scmp.ge.s32.totalorder %s17, 4
      %s27 = sphi 0, %s29
      %s30 = sphi 0, %s27
      %s31 = sphi 0, %s30
      %s47 = sphi 0, %s31
      %s51 = sphi 0, %s51
      %s53 = sphi 0, %s51
      %s54 = sphi 0, %s53
      %s68 = sphi 0, %s54
      %s72 = sphi 0, %s72
      %s74 = sphi 0, %s72
      %s75 = sphi 0, %s74
      %s89 = sphi 0, %s75
      %s93 = sphi 0, %s93
      %s95 = sphi 0, %s93
      %s96 = sphi 0, %s95
      %s110 = sphi 0, %s96
      %s114 = sphi 0, %s114
      %s116 = sphi 0, %s114
      %s117 = sphi 0, %s116
      %s131 = sphi 0, %s117
      %s135 = sphi 0, %s135
      %s137 = sphi 0, %s135
      %s138 = sphi 0, %s137
      %s152 = sphi 0, %s138
      %s156 = sphi 0, %s156
      %s158 = sphi 0, %s156
      %s159 = sphi 0, %s158
      %s173 = sphi 0, %s159
      %s179 = sphi 0, %s181
      %s182 = sphi 0, %s179
      %s183 = sphi 0, %s182
      %s199 = sphi 0, %s183
    $region4: #{tpu_custom_call.1} parent=1 // loop_header_branch
      %20 = sbr.rel (%p18) target = $region8
    $region5: #{tpu_custom_call.1} parent=1 // loop_body
      %s22 = ssub.s32 %s17, 1
      %s23 = ssub.s32 %s17, 2
      %s24 = sadd.s32 %s17, 1
      %s25 = ssub.s32 %s17, %s24
      %p26 = scmp.eq.s32.totalorder %s25, 0
      %s28 = sadd.s32 %s27, 1
      %s29 = scalar_select %p26, %s27, %s28
      %p32 = pneg %p26
      %p33 = scmp.eq.s32.totalorder %s17, 1
      %p34 = por %p32, %p33
      %p35 = scmp.ne.s32.totalorder %s27, %s30
      %p36 = scmp.eq.s32.totalorder %s17, 0
      %p37 = por %p35, %p36
      %p38 = scmp.ne.s32.totalorder %s27, %s30
      %p39 = scmp.eq.s32.totalorder %s22, 1
      %p40 = por %p38, %p39
      %p41 = scmp.ne.s32.totalorder %s30, %s31
      %p42 = scmp.eq.s32.totalorder %s22, 0
      %p43 = por %p41, %p42
      %p44 = scmp.ne.s32.totalorder %s30, %s31
      %p45 = scmp.eq.s32.totalorder %s23, 1
      %p46 = por %p44, %p45
      %p48 = scmp.ne.s32.totalorder %s31, %s47
      %p49 = scmp.eq.s32.totalorder %s23, 0
      %p50 = por %p48, %p49
      %s52 = sadd.s32 %s51, 1
      %p55 = scmp.eq.s32.totalorder %s17, 1
      %p56 = scmp.ne.s32.totalorder %s51, %s53
      %p57 = scmp.eq.s32.totalorder %s17, 0
      %p58 = por %p56, %p57
      %p59 = scmp.ne.s32.totalorder %s51, %s53
      %p60 = scmp.eq.s32.totalorder %s22, 1
      %p61 = por %p59, %p60
      %p62 = scmp.ne.s32.totalorder %s53, %s54
      %p63 = scmp.eq.s32.totalorder %s22, 0
      %p64 = por %p62, %p63
      %p65 = scmp.ne.s32.totalorder %s53, %s54
      %p66 = scmp.eq.s32.totalorder %s23, 1
      %p67 = por %p65, %p66
      %p69 = scmp.ne.s32.totalorder %s54, %s68
      %p70 = scmp.eq.s32.totalorder %s23, 0
      %p71 = por %p69, %p70
      %s73 = sadd.s32 %s72, 1
      %p76 = scmp.eq.s32.totalorder %s17, 1
      %p77 = scmp.ne.s32.totalorder %s72, %s74
      %p78 = scmp.eq.s32.totalorder %s17, 0
      %p79 = por %p77, %p78
      %p80 = scmp.ne.s32.totalorder %s72, %s74
      %p81 = scmp.eq.s32.totalorder %s22, 1
      %p82 = por %p80, %p81
      %p83 = scmp.ne.s32.totalorder %s74, %s75
      %p84 = scmp.eq.s32.totalorder %s22, 0
      %p85 = por %p83, %p84
      %p86 = scmp.ne.s32.totalorder %s74, %s75
      %p87 = scmp.eq.s32.totalorder %s23, 1
      %p88 = por %p86, %p87
      %p90 = scmp.ne.s32.totalorder %s75, %s89
      %p91 = scmp.eq.s32.totalorder %s23, 0
      %p92 = por %p90, %p91
      %s94 = sadd.s32 %s93, 1
      %p97 = scmp.eq.s32.totalorder %s17, 1
      %p98 = scmp.ne.s32.totalorder %s93, %s95
      %p99 = scmp.eq.s32.totalorder %s17, 0
      %p100 = por %p98, %p99
      %p101 = scmp.ne.s32.totalorder %s93, %s95
      %p102 = scmp.eq.s32.totalorder %s22, 1
      %p103 = por %p101, %p102
      %p104 = scmp.ne.s32.totalorder %s95, %s96
      %p105 = scmp.eq.s32.totalorder %s22, 0
      %p106 = por %p104, %p105
      %p107 = scmp.ne.s32.totalorder %s95, %s96
      %p108 = scmp.eq.s32.totalorder %s23, 1
      %p109 = por %p107, %p108
      %p111 = scmp.ne.s32.totalorder %s96, %s110
      %p112 = scmp.eq.s32.totalorder %s23, 0
      %p113 = por %p111, %p112
      %s115 = sadd.s32 %s114, 1
      %p118 = scmp.eq.s32.totalorder %s17, 1
      %p119 = scmp.ne.s32.totalorder %s114, %s116
      %p120 = scmp.eq.s32.totalorder %s17, 0
      %p121 = por %p119, %p120
      %p122 = scmp.ne.s32.totalorder %s114, %s116
      %p123 = scmp.eq.s32.totalorder %s22, 1
      %p124 = por %p122, %p123
      %p125 = scmp.ne.s32.totalorder %s116, %s117
      %p126 = scmp.eq.s32.totalorder %s22, 0
      %p127 = por %p125, %p126
      %p128 = scmp.ne.s32.totalorder %s116, %s117
      %p129 = scmp.eq.s32.totalorder %s23, 1
      %p130 = por %p128, %p129
      %p132 = scmp.ne.s32.totalorder %s117, %s131
      %p133 = scmp.eq.s32.totalorder %s23, 0
      %p134 = por %p132, %p133
      %s136 = sadd.s32 %s135, 1
      %p139 = scmp.eq.s32.totalorder %s17, 1
      %p140 = scmp.ne.s32.totalorder %s135, %s137
      %p141 = scmp.eq.s32.totalorder %s17, 0
      %p142 = por %p140, %p141
      %p143 = scmp.ne.s32.totalorder %s135, %s137
      %p144 = scmp.eq.s32.totalorder %s22, 1
      %p145 = por %p143, %p144
      %p146 = scmp.ne.s32.totalorder %s137, %s138
      %p147 = scmp.eq.s32.totalorder %s22, 0
      %p148 = por %p146, %p147
      %p149 = scmp.ne.s32.totalorder %s137, %s138
      %p150 = scmp.eq.s32.totalorder %s23, 1
      %p151 = por %p149, %p150
      %p153 = scmp.ne.s32.totalorder %s138, %s152
      %p154 = scmp.eq.s32.totalorder %s23, 0
      %p155 = por %p153, %p154
      %s157 = sadd.s32 %s156, 1
      %p160 = scmp.eq.s32.totalorder %s17, 1
      %p161 = scmp.ne.s32.totalorder %s156, %s158
      %p162 = scmp.eq.s32.totalorder %s17, 0
      %p163 = por %p161, %p162
      %p164 = scmp.ne.s32.totalorder %s156, %s158
      %p165 = scmp.eq.s32.totalorder %s22, 1
      %p166 = por %p164, %p165
      %p167 = scmp.ne.s32.totalorder %s158, %s159
      %p168 = scmp.eq.s32.totalorder %s22, 0
      %p169 = por %p167, %p168
      %p170 = scmp.ne.s32.totalorder %s158, %s159
      %p171 = scmp.eq.s32.totalorder %s23, 1
      %p172 = por %p170, %p171
      %p174 = scmp.ne.s32.totalorder %s159, %s173
      %p175 = scmp.eq.s32.totalorder %s23, 0
      %p176 = por %p174, %p175
      %s177 = ssub.s32 %s17, %s24
      %p178 = scmp.eq.s32.totalorder %s177, 0
      %s180 = sadd.s32 %s179, 1
      %s181 = scalar_select %p178, %s179, %s180
      %p184 = pneg %p178
      %p185 = scmp.eq.s32.totalorder %s17, 1
      %p186 = por %p184, %p185
      %p187 = scmp.ne.s32.totalorder %s179, %s182
      %p188 = scmp.eq.s32.totalorder %s17, 0
      %p189 = por %p187, %p188
      %p190 = scmp.ne.s32.totalorder %s179, %s182
      %p191 = scmp.eq.s32.totalorder %s22, 1
      %p192 = por %p190, %p191
      %p193 = scmp.ne.s32.totalorder %s182, %s183
      %p194 = scmp.eq.s32.totalorder %s22, 0
      %p195 = por %p193, %p194
      %p196 = scmp.ne.s32.totalorder %s182, %s183
      %p197 = scmp.eq.s32.totalorder %s23, 1
      %p198 = por %p196, %p197
      %p200 = scmp.ne.s32.totalorder %s183, %s199
      %p201 = scmp.eq.s32.totalorder %s23, 0
      %p202 = por %p200, %p201
      %p203 = scmp.le.s32.totalorder 1, %s17
      %p204 = scmp.lt.s32.totalorder %s17, 3
      %p205 = pnand %p203, %p204
      %p206 = pneg %p205
      // Predicated region
      $region9: #{tpu_custom_call.1} parent=5 // pred_check
        _
      $region10: #{tpu_custom_call.1} parent=5 // pred_check_branch
        %208 = sbr.rel (%p205) target = $region12
      $region11: #{tpu_custom_call.1} parent=5 // pred_region
        %s209 = ssub.s32 %s17, 1
        // Predicated region
        $region13: #{tpu_custom_call.1} parent=11 // pred_check
          %p210 = pneg %p64
        $region14: #{tpu_custom_call.1} parent=11 // pred_check_branch
          %212 = sbr.rel (%p210) target = $region16
        $region15: #{tpu_custom_call.1} parent=11 // pred_region
          _
        $region16: #{tpu_custom_call.1} parent=11 // pred_fallthru
          _
        // Predicated region
        $region17: #{tpu_custom_call.1} parent=11 // pred_check
          %p213 = pneg %p85
        $region18: #{tpu_custom_call.1} parent=11 // pred_check_branch
          %215 = sbr.rel (%p213) target = $region20
        $region19: #{tpu_custom_call.1} parent=11 // pred_region
          _
        $region20: #{tpu_custom_call.1} parent=11 // pred_fallthru
          _
        // Predicated region
        $region21: #{tpu_custom_call.1} parent=11 // pred_check
          %p216 = pneg %p106
        $region22: #{tpu_custom_call.1} parent=11 // pred_check_branch
          %218 = sbr.rel (%p216) target = $region24
        $region23: #{tpu_custom_call.1} parent=11 // pred_region
          _
        $region24: #{tpu_custom_call.1} parent=11 // pred_fallthru
          _
        // Predicated region
        $region25: #{tpu_custom_call.1} parent=11 // pred_check
          %p219 = pneg %p127
        $region26: #{tpu_custom_call.1} parent=11 // pred_check_branch
          %221 = sbr.rel (%p219) target = $region28
        $region27: #{tpu_custom_call.1} parent=11 // pred_region
          _
        $region28: #{tpu_custom_call.1} parent=11 // pred_fallthru
          _
        // Predicated region
        $region29: #{tpu_custom_call.1} parent=11 // pred_check
          %p222 = pneg %p148
        $region30: #{tpu_custom_call.1} parent=11 // pred_check_branch
          %224 = sbr.rel (%p222) target = $region32
        $region31: #{tpu_custom_call.1} parent=11 // pred_region
          _
        $region32: #{tpu_custom_call.1} parent=11 // pred_fallthru
          _
        // Predicated region
        $region33: #{tpu_custom_call.1} parent=11 // pred_check
          %p225 = pneg %p169
        $region34: #{tpu_custom_call.1} parent=11 // pred_check_branch
          %227 = sbr.rel (%p225) target = $region36
        $region35: #{tpu_custom_call.1} parent=11 // pred_region
          _
        $region36: #{tpu_custom_call.1} parent=11 // pred_fallthru
          _
      $region12: #{tpu_custom_call.1} parent=5 // pred_fallthru
        _
      %p228 = scmp.lt.s32.totalorder %s17, 2
      // Predicated region
      $region37: #{tpu_custom_call.1} parent=5 // pred_check
        %p229 = pneg %p228
      $region38: #{tpu_custom_call.1} parent=5 // pred_check_branch
        %231 = sbr.rel (%p229) target = $region40
      $region39: #{tpu_custom_call.1} parent=5 // pred_region
        // Predicated region
        $region41: #{tpu_custom_call.1} parent=39 // pred_check
          %p232 = pneg %p37
        $region42: #{tpu_custom_call.1} parent=39 // pred_check_branch
          %234 = sbr.rel (%p232) target = $region44
        $region43: #{tpu_custom_call.1} parent=39 // pred_region
          %s235 = smul.u32 64, %s17
          %p236 = scmp.lt.s32.totalorder %s235, 127
          %s237 = scalar_select %p236, %s235, 127
          %s238 = smul.addr %s237, 8
          %s239 = scalar_lea.vmem %s0, %s238
          %s240 = smul.u32 64, %s17
        $region44: #{tpu_custom_call.1} parent=39 // pred_fallthru
          _
      $region40: #{tpu_custom_call.1} parent=5 // pred_fallthru
        _
      %p241 = scmp.le.s32.totalorder 1, %s17
      %p242 = scmp.lt.s32.totalorder %s17, 3
      %p243 = pnand %p241, %p242
      %p244 = pneg %p243
      // Predicated region
      $region45: #{tpu_custom_call.1} parent=5 // pred_check
        _
      $region46: #{tpu_custom_call.1} parent=5 // pred_check_branch
        %246 = sbr.rel (%p243) target = $region48
      $region47: #{tpu_custom_call.1} parent=5 // pred_region
        %s247 = ssub.s32 %s17, 1
        %s248 = smul.u32 64, %s22
        %p249 = scmp.lt.s32.totalorder %s248, 127
        %s250 = scalar_select %p249, %s248, 127
        %s251 = smul.addr %s250, 8
        %s252 = scalar_lea.vmem %s0, %s251
        %p253 = pneg %p43
        %p254 = pneg %p40
        %p255 = pneg %p64
        %p256 = pneg %p61
        %p257 = pneg %p85
        %p258 = pneg %p82
        %p259 = pneg %p106
        %p260 = pneg %p103
        %p261 = pneg %p127
        %p262 = pneg %p124
        %p263 = pneg %p148
        %p264 = pneg %p145
        %p265 = pneg %p169
        %p266 = pneg %p166
        %p267 = pneg %p195
        %p268 = pneg %p192
        %s269 = sand.u32 %s182, 1
        %s270 = scalar_lea.sflag [#allocation4], %s269
        %s271 = sand.u32 %s182, 1
        %s272 = smul.addr %s271, 4
        %s273 = scalar_lea.vmem [#allocation3], %s272
        %s274 = smul.u32 64, %s22
        %p275 = scmp.lt.s32.totalorder %s274, 127
        %s276 = scalar_select %p275, %s274, 127
        %s277 = smul.addr %s276, 8
        %s278 = scalar_lea.vmem %s0, %s277
        %s279 = smul.u32 64, %s22
        %s280 = smul.u32 4, %s22
        %v281 = vld [vmem:[%s278] sm:$0xff]
        %v282 = vld [vmem:[%s278 + $0x8] sm:$0xff]
        %v283 = vld [vmem:[%s278 + $0x10] sm:$0xff]
        %v284 = vld [vmem:[%s278 + $0x18] sm:$0xff]
        %v285 = vld [vmem:[%s278 + $0x20] sm:$0xff]
        %v286 = vld [vmem:[%s278 + $0x28] sm:$0xff]
        %v287 = vld [vmem:[%s278 + $0x30] sm:$0xff]
        %v288 = vld [vmem:[%s278 + $0x38] sm:$0xff]
        %v289 = vld [vmem:[%s278 + $0x40] sm:$0xff]
        %v290 = vld [vmem:[%s278 + $0x48] sm:$0xff]
        %v291 = vld [vmem:[%s278 + $0x50] sm:$0xff]
        %v292 = vld [vmem:[%s278 + $0x58] sm:$0xff]
        %v293 = vld [vmem:[%s278 + $0x60] sm:$0xff]
        %v294 = vld [vmem:[%s278 + $0x68] sm:$0xff]
        %v295 = vld [vmem:[%s278 + $0x70] sm:$0xff]
        %v296 = vld [vmem:[%s278 + $0x78] sm:$0xff]
        %v297 = vld [vmem:[%s278 + $0x80] sm:$0xff]
        %v298 = vld [vmem:[%s278 + $0x88] sm:$0xff]
        %v299 = vld [vmem:[%s278 + $0x90] sm:$0xff]
        %v300 = vld [vmem:[%s278 + $0x98] sm:$0xff]
        %v301 = vld [vmem:[%s278 + $0xa0] sm:$0xff]
        %v302 = vld [vmem:[%s278 + $0xa8] sm:$0xff]
        %v303 = vld [vmem:[%s278 + $0xb0] sm:$0xff]
        %v304 = vld [vmem:[%s278 + $0xb8] sm:$0xff]
        %v305 = vld [vmem:[%s278 + $0xc0] sm:$0xff]
        %v306 = vld [vmem:[%s278 + $0xc8] sm:$0xff]
        %v307 = vld [vmem:[%s278 + $0xd0] sm:$0xff]
        %v308 = vld [vmem:[%s278 + $0xd8] sm:$0xff]
        %v309 = vld [vmem:[%s278 + $0xe0] sm:$0xff]
        %v310 = vld [vmem:[%s278 + $0xe8] sm:$0xff]
        %v311 = vld [vmem:[%s278 + $0xf0] sm:$0xff]
        %v312 = vld [vmem:[%s278 + $0xf8] sm:$0xff]
        %v313 = vld [vmem:[%s278 + $0x100] sm:$0xff]
        %v314 = vld [vmem:[%s278 + $0x108] sm:$0xff]
        %v315 = vld [vmem:[%s278 + $0x110] sm:$0xff]
        %v316 = vld [vmem:[%s278 + $0x118] sm:$0xff]
        %v317 = vld [vmem:[%s278 + $0x120] sm:$0xff]
        %v318 = vld [vmem:[%s278 + $0x128] sm:$0xff]
        %v319 = vld [vmem:[%s278 + $0x130] sm:$0xff]
        %v320 = vld [vmem:[%s278 + $0x138] sm:$0xff]
        %v321 = vld [vmem:[%s278 + $0x140] sm:$0xff]
        %v322 = vld [vmem:[%s278 + $0x148] sm:$0xff]
        %v323 = vld [vmem:[%s278 + $0x150] sm:$0xff]
        %v324 = vld [vmem:[%s278 + $0x158] sm:$0xff]
        %v325 = vld [vmem:[%s278 + $0x160] sm:$0xff]
        %v326 = vld [vmem:[%s278 + $0x168] sm:$0xff]
        %v327 = vld [vmem:[%s278 + $0x170] sm:$0xff]
        %v328 = vld [vmem:[%s278 + $0x178] sm:$0xff]
        %v329 = vld [vmem:[%s278 + $0x180] sm:$0xff]
        %v330 = vld [vmem:[%s278 + $0x188] sm:$0xff]
        %v331 = vld [vmem:[%s278 + $0x190] sm:$0xff]
        %v332 = vld [vmem:[%s278 + $0x198] sm:$0xff]
        %v333 = vld [vmem:[%s278 + $0x1a0] sm:$0xff]
        %v334 = vld [vmem:[%s278 + $0x1a8] sm:$0xff]
        %v335 = vld [vmem:[%s278 + $0x1b0] sm:$0xff]
        %v336 = vld [vmem:[%s278 + $0x1b8] sm:$0xff]
        %v337 = vld [vmem:[%s278 + $0x1c0] sm:$0xff]
        %v338 = vld [vmem:[%s278 + $0x1c8] sm:$0xff]
        %v339 = vld [vmem:[%s278 + $0x1d0] sm:$0xff]
        %v340 = vld [vmem:[%s278 + $0x1d8] sm:$0xff]
        %v341 = vld [vmem:[%s278 + $0x1e0] sm:$0xff]
        %v342 = vld [vmem:[%s278 + $0x1e8] sm:$0xff]
        %v343 = vld [vmem:[%s278 + $0x1f0] sm:$0xff]
        %v344 = vld [vmem:[%s278 + $0x1f8] sm:$0xff]
        %v345 = vld [vmem:[%s1] sm:$0xff]
        %v346 = vld [vmem:[%s1 + $0x8] sm:$0xff]
        %v347 = vld [vmem:[%s1 + $0x10] sm:$0xff]
        %v348 = vld [vmem:[%s1 + $0x18] sm:$0xff]
        %v349 = vld [vmem:[%s1 + $0x20] sm:$0xff]
        %v350 = vld [vmem:[%s1 + $0x28] sm:$0xff]
        %v351 = vld [vmem:[%s1 + $0x30] sm:$0xff]
        %v352 = vld [vmem:[%s1 + $0x38] sm:$0xff]
        %v353 = vld [vmem:[%s2] sm:$0xff]
        %v354 = vld [vmem:[%s2 + $0x8] sm:$0xff]
        %v355 = vld [vmem:[%s2 + $0x10] sm:$0xff]
        %v356 = vld [vmem:[%s2 + $0x18] sm:$0xff]
        %v357 = vld [vmem:[%s2 + $0x20] sm:$0xff]
        %v358 = vld [vmem:[%s2 + $0x28] sm:$0xff]
        %v359 = vld [vmem:[%s2 + $0x30] sm:$0xff]
        %v360 = vld [vmem:[%s2 + $0x38] sm:$0xff]
        %362 = vset.pattern.permute.xlu0 0
        %363 = vperm.xlu0 %362, %v353
        %v364 = vpop.permute.xlu0 %363
        %367 = vset.pattern.permute.xlu0 0
        %368 = vperm.xlu0 %367, %v354
        %v369 = vpop.permute.xlu0 %368
        %372 = vset.pattern.permute.xlu0 0
        %373 = vperm.xlu0 %372, %v355
        %v374 = vpop.permute.xlu0 %373
        %377 = vset.pattern.permute.xlu0 0
        %378 = vperm.xlu0 %377, %v356
        %v379 = vpop.permute.xlu0 %378
        %382 = vset.pattern.permute.xlu0 0
        %383 = vperm.xlu0 %382, %v357
        %v384 = vpop.permute.xlu0 %383
        %387 = vset.pattern.permute.xlu0 0
        %388 = vperm.xlu0 %387, %v358
        %v389 = vpop.permute.xlu0 %388
        %392 = vset.pattern.permute.xlu0 0
        %393 = vperm.xlu0 %392, %v359
        %v394 = vpop.permute.xlu0 %393
        %397 = vset.pattern.permute.xlu0 0
        %398 = vperm.xlu0 %397, %v360
        %v399 = vpop.permute.xlu0 %398
        %vm401 = vcmask 343040
        %v403 = vsel %vm401, %v345, 0
        %v406 = vsel %vm401, %v346, 0
        %v409 = vsel %vm401, %v347, 0
        %v412 = vsel %vm401, %v348, 0
        %v415 = vsel %vm401, %v349, 0
        %v418 = vsel %vm401, %v350, 0
        %v421 = vsel %vm401, %v351, 0
        %v424 = vsel %vm401, %v352, 0
        %v427 = vsel %vm401, %v281, 0
        %v430 = vsel %vm401, %v282, 0
        %v433 = vsel %vm401, %v283, 0
        %v436 = vsel %vm401, %v284, 0
        %v439 = vsel %vm401, %v285, 0
        %v442 = vsel %vm401, %v286, 0
        %v445 = vsel %vm401, %v287, 0
        %v448 = vsel %vm401, %v288, 0
        %v451 = vsel %vm401, %v289, 0
        %v454 = vsel %vm401, %v290, 0
        %v457 = vsel %vm401, %v291, 0
        %v460 = vsel %vm401, %v292, 0
        %v463 = vsel %vm401, %v293, 0
        %v466 = vsel %vm401, %v294, 0
        %v469 = vsel %vm401, %v295, 0
        %v472 = vsel %vm401, %v296, 0
        %v475 = vsel %vm401, %v297, 0
        %v478 = vsel %vm401, %v298, 0
        %v481 = vsel %vm401, %v299, 0
        %v484 = vsel %vm401, %v300, 0
        %v487 = vsel %vm401, %v301, 0
        %v490 = vsel %vm401, %v302, 0
        %v493 = vsel %vm401, %v303, 0
        %v496 = vsel %vm401, %v304, 0
        %v499 = vsel %vm401, %v305, 0
        %v502 = vsel %vm401, %v306, 0
        %v505 = vsel %vm401, %v307, 0
        %v508 = vsel %vm401, %v308, 0
        %v511 = vsel %vm401, %v309, 0
        %v514 = vsel %vm401, %v310, 0
        %v517 = vsel %vm401, %v311, 0
        %v520 = vsel %vm401, %v312, 0
        %v523 = vsel %vm401, %v313, 0
        %v526 = vsel %vm401, %v314, 0
        %v529 = vsel %vm401, %v315, 0
        %v532 = vsel %vm401, %v316, 0
        %v535 = vsel %vm401, %v317, 0
        %v538 = vsel %vm401, %v318, 0
        %v541 = vsel %vm401, %v319, 0
        %v544 = vsel %vm401, %v320, 0
        %v547 = vsel %vm401, %v321, 0
        %v550 = vsel %vm401, %v322, 0
        %v553 = vsel %vm401, %v323, 0
        %v556 = vsel %vm401, %v324, 0
        %v559 = vsel %vm401, %v325, 0
        %v562 = vsel %vm401, %v326, 0
        %v565 = vsel %vm401, %v327, 0
        %v568 = vsel %vm401, %v328, 0
        %v571 = vsel %vm401, %v329, 0
        %v574 = vsel %vm401, %v330, 0
        %v577 = vsel %vm401, %v331, 0
        %v580 = vsel %vm401, %v332, 0
        %v583 = vsel %vm401, %v333, 0
        %v586 = vsel %vm401, %v334, 0
        %v589 = vsel %vm401, %v335, 0
        %v592 = vsel %vm401, %v336, 0
        %v595 = vsel %vm401, %v337, 0
        %v598 = vsel %vm401, %v338, 0
        %v601 = vsel %vm401, %v339, 0
        %v604 = vsel %vm401, %v340, 0
        %v607 = vsel %vm401, %v341, 0
        %v610 = vsel %vm401, %v342, 0
        %v613 = vsel %vm401, %v343, 0
        %v616 = vsel %vm401, %v344, 0
        %618 = vmatprep.subr.mxu0 0.0
        %619 = vmatpush1.xpose.msra.mxu0 %v472
        %620 = vmatprep.subr.mxu0 0.0
        %621 = vmatpush1.xpose.msra.mxu0 %v469
        %622 = vmatprep.subr.mxu0 0.0
        %623 = vmatpush1.xpose.msra.mxu0 %v466
        %624 = vmatprep.subr.mxu0 0.0
        %625 = vmatpush1.xpose.msra.mxu0 %v463
        %626 = vmatprep.subr.mxu0 0.0
        %627 = vmatpush1.xpose.msra.mxu0 %v460
        %628 = vmatprep.subr.mxu0 0.0
        %629 = vmatpush1.xpose.msra.mxu0 %v457
        %630 = vmatprep.subr.mxu0 0.0
        %631 = vmatpush1.xpose.msra.mxu0 %v454
        %632 = vmatprep.subr.mxu0 0.0
        %633 = vmatpush1.xpose.msra.mxu0 %v451
        %634 = vmatprep.subr.mxu0 0.0
        %635 = vmatpush1.xpose.msra.mxu0 %v448
        %636 = vmatprep.subr.mxu0 0.0
        %637 = vmatpush1.xpose.msra.mxu0 %v445
        %638 = vmatprep.subr.mxu0 0.0
        %639 = vmatpush1.xpose.msra.mxu0 %v442
        %640 = vmatprep.subr.mxu0 0.0
        %641 = vmatpush1.xpose.msra.mxu0 %v439
        %642 = vmatprep.subr.mxu0 0.0
        %643 = vmatpush1.xpose.msra.mxu0 %v436
        %644 = vmatprep.subr.mxu0 0.0
        %645 = vmatpush1.xpose.msra.mxu0 %v433
        %646 = vmatprep.subr.mxu0 0.0
        %647 = vmatpush1.xpose.msra.mxu0 %v430
        %648 = vmatprep.subr.mxu0 0.0
        %649 = vmatpush1.xpose.msra.mxu0 %v427
        %650 = vmatprep.subr.mxu0 0.0
        %651 = vmatpush2.xpose.msra.mxu0 %v520
        %652 = vmatprep.subr.mxu0 0.0
        %653 = vmatpush2.xpose.msra.mxu0 %v517
        %654 = vmatprep.subr.mxu0 0.0
        %655 = vmatpush2.xpose.msra.mxu0 %v514
        %656 = vmatprep.subr.mxu0 0.0
        %657 = vmatpush2.xpose.msra.mxu0 %v511
        %658 = vmatprep.subr.mxu0 0.0
        %659 = vmatpush2.xpose.msra.mxu0 %v508
        %660 = vmatprep.subr.mxu0 0.0
        %661 = vmatpush2.xpose.msra.mxu0 %v505
        %662 = vmatprep.subr.mxu0 0.0
        %663 = vmatpush2.xpose.msra.mxu0 %v502
        %664 = vmatprep.subr.mxu0 0.0
        %665 = vmatpush2.xpose.msra.mxu0 %v499
        %666 = vmatprep.subr.mxu0 0.0
        %667 = vmatpush2.xpose.msra.mxu0 %v496
        %668 = vmatprep.subr.mxu0 0.0
        %669 = vmatpush2.xpose.msra.mxu0 %v493
        %670 = vmatprep.subr.mxu0 0.0
        %671 = vmatpush2.xpose.msra.mxu0 %v490
        %672 = vmatprep.subr.mxu0 0.0
        %673 = vmatpush2.xpose.msra.mxu0 %v487
        %674 = vmatprep.subr.mxu0 0.0
        %675 = vmatpush2.xpose.msra.mxu0 %v484
        %676 = vmatprep.subr.mxu0 0.0
        %677 = vmatpush2.xpose.msra.mxu0 %v481
        %678 = vmatprep.subr.mxu0 0.0
        %679 = vmatpush2.xpose.msra.mxu0 %v478
        %680 = vmatprep.subr.mxu0 0.0
        %681 = vmatpush2.xpose.msra.mxu0 %v475
        %682 = vmatprep.mubr.f32.mxu0 0.0
        %683 = vmatmul.mubr.f32.gmra.mxu0 %v403
        %v684 = vpop.f32.mrf.mxu0
        %v685 = vadd.f32 %v364, %v684
        %v686 = vpop.f32.mrf.mxu0
        %v687 = vadd.f32 %v364, %v686
        %688 = vmatprep.mubr.f32.mxu0 0.0
        %689 = vmatmul.mubr.f32.gmra.mxu0 %v406
        %v690 = vpop.f32.mrf.mxu0
        %v691 = vadd.f32 %v369, %v690
        %v692 = vpop.f32.mrf.mxu0
        %v693 = vadd.f32 %v369, %v692
        %694 = vmatprep.mubr.f32.mxu0 0.0
        %695 = vmatmul.mubr.f32.gmra.mxu0 %v409
        %v696 = vpop.f32.mrf.mxu0
        %v697 = vadd.f32 %v374, %v696
        %v698 = vpop.f32.mrf.mxu0
        %v699 = vadd.f32 %v374, %v698
        %700 = vmatprep.mubr.f32.mxu0 0.0
        %701 = vmatmul.mubr.f32.gmra.mxu0 %v412
        %v702 = vpop.f32.mrf.mxu0
        %v703 = vadd.f32 %v379, %v702
        %v704 = vpop.f32.mrf.mxu0
        %v705 = vadd.f32 %v379, %v704
        %706 = vmatprep.mubr.f32.mxu0 0.0
        %707 = vmatmul.mubr.f32.gmra.mxu0 %v415
        %v708 = vpop.f32.mrf.mxu0
        %v709 = vadd.f32 %v384, %v708
        %v710 = vpop.f32.mrf.mxu0
        %v711 = vadd.f32 %v384, %v710
        %712 = vmatprep.mubr.f32.mxu0 0.0
        %713 = vmatmul.mubr.f32.gmra.mxu0 %v418
        %v714 = vpop.f32.mrf.mxu0
        %v715 = vadd.f32 %v389, %v714
        %v716 = vpop.f32.mrf.mxu0
        %v717 = vadd.f32 %v389, %v716
        %718 = vmatprep.mubr.f32.mxu0 0.0
        %719 = vmatmul.mubr.f32.gmra.mxu0 %v421
        %v720 = vpop.f32.mrf.mxu0
        %v721 = vadd.f32 %v394, %v720
        %v722 = vpop.f32.mrf.mxu0
        %v723 = vadd.f32 %v394, %v722
        %724 = vmatprep.mubr.f32.mxu0 0.0
        %725 = vmatmul.mubr.f32.gmra.mxu0 %v424
        %v726 = vpop.f32.mrf.mxu0
        %v727 = vadd.f32 %v399, %v726
        %v728 = vpop.f32.mrf.mxu0
        %v729 = vadd.f32 %v399, %v728
        %730 = vdwg.mxu0
        %731 = vmatprep.subr.mxu0 0.0
        %732 = vmatpush1.xpose.msra.mxu0 %v568
        %733 = vmatprep.subr.mxu0 0.0
        %734 = vmatpush1.xpose.msra.mxu0 %v565
        %735 = vmatprep.subr.mxu0 0.0
        %736 = vmatpush1.xpose.msra.mxu0 %v562
        %737 = vmatprep.subr.mxu0 0.0
        %738 = vmatpush1.xpose.msra.mxu0 %v559
        %739 = vmatprep.subr.mxu0 0.0
        %740 = vmatpush1.xpose.msra.mxu0 %v556
        %741 = vmatprep.subr.mxu0 0.0
        %742 = vmatpush1.xpose.msra.mxu0 %v553
        %743 = vmatprep.subr.mxu0 0.0
        %744 = vmatpush1.xpose.msra.mxu0 %v550
        %745 = vmatprep.subr.mxu0 0.0
        %746 = vmatpush1.xpose.msra.mxu0 %v547
        %747 = vmatprep.subr.mxu0 0.0
        %748 = vmatpush1.xpose.msra.mxu0 %v544
        %749 = vmatprep.subr.mxu0 0.0
        %750 = vmatpush1.xpose.msra.mxu0 %v541
        %751 = vmatprep.subr.mxu0 0.0
        %752 = vmatpush1.xpose.msra.mxu0 %v538
        %753 = vmatprep.subr.mxu0 0.0
        %754 = vmatpush1.xpose.msra.mxu0 %v535
        %755 = vmatprep.subr.mxu0 0.0
        %756 = vmatpush1.xpose.msra.mxu0 %v532
        %757 = vmatprep.subr.mxu0 0.0
        %758 = vmatpush1.xpose.msra.mxu0 %v529
        %759 = vmatprep.subr.mxu0 0.0
        %760 = vmatpush1.xpose.msra.mxu0 %v526
        %761 = vmatprep.subr.mxu0 0.0
        %762 = vmatpush1.xpose.msra.mxu0 %v523
        %763 = vmatprep.subr.mxu0 0.0
        %764 = vmatpush2.xpose.msra.mxu0 %v616
        %765 = vmatprep.subr.mxu0 0.0
        %766 = vmatpush2.xpose.msra.mxu0 %v613
        %767 = vmatprep.subr.mxu0 0.0
        %768 = vmatpush2.xpose.msra.mxu0 %v610
        %769 = vmatprep.subr.mxu0 0.0
        %770 = vmatpush2.xpose.msra.mxu0 %v607
        %771 = vmatprep.subr.mxu0 0.0
        %772 = vmatpush2.xpose.msra.mxu0 %v604
        %773 = vmatprep.subr.mxu0 0.0
        %774 = vmatpush2.xpose.msra.mxu0 %v601
        %775 = vmatprep.subr.mxu0 0.0
        %776 = vmatpush2.xpose.msra.mxu0 %v598
        %777 = vmatprep.subr.mxu0 0.0
        %778 = vmatpush2.xpose.msra.mxu0 %v595
        %779 = vmatprep.subr.mxu0 0.0
        %780 = vmatpush2.xpose.msra.mxu0 %v592
        %781 = vmatprep.subr.mxu0 0.0
        %782 = vmatpush2.xpose.msra.mxu0 %v589
        %783 = vmatprep.subr.mxu0 0.0
        %784 = vmatpush2.xpose.msra.mxu0 %v586
        %785 = vmatprep.subr.mxu0 0.0
        %786 = vmatpush2.xpose.msra.mxu0 %v583
        %787 = vmatprep.subr.mxu0 0.0
        %788 = vmatpush2.xpose.msra.mxu0 %v580
        %789 = vmatprep.subr.mxu0 0.0
        %790 = vmatpush2.xpose.msra.mxu0 %v577
        %791 = vmatprep.subr.mxu0 0.0
        %792 = vmatpush2.xpose.msra.mxu0 %v574
        %793 = vmatprep.subr.mxu0 0.0
        %794 = vmatpush2.xpose.msra.mxu0 %v571
        %795 = vmatprep.mubr.f32.mxu0 0.0
        %796 = vmatmul.mubr.f32.gmra.mxu0 %v403
        %v797 = vpop.f32.mrf.mxu0
        %v798 = vadd.f32 %v364, %v797
        %v799 = vpop.f32.mrf.mxu0
        %v800 = vadd.f32 %v364, %v799
        %801 = vmatprep.mubr.f32.mxu0 0.0
        %802 = vmatmul.mubr.f32.gmra.mxu0 %v406
        %v803 = vpop.f32.mrf.mxu0
        %v804 = vadd.f32 %v369, %v803
        %v805 = vpop.f32.mrf.mxu0
        %v806 = vadd.f32 %v369, %v805
        %807 = vmatprep.mubr.f32.mxu0 0.0
        %808 = vmatmul.mubr.f32.gmra.mxu0 %v409
        %v809 = vpop.f32.mrf.mxu0
        %v810 = vadd.f32 %v374, %v809
        %v811 = vpop.f32.mrf.mxu0
        %v812 = vadd.f32 %v374, %v811
        %813 = vmatprep.mubr.f32.mxu0 0.0
        %814 = vmatmul.mubr.f32.gmra.mxu0 %v412
        %v815 = vpop.f32.mrf.mxu0
        %v816 = vadd.f32 %v379, %v815
        %v817 = vpop.f32.mrf.mxu0
        %v818 = vadd.f32 %v379, %v817
        %819 = vmatprep.mubr.f32.mxu0 0.0
        %820 = vmatmul.mubr.f32.gmra.mxu0 %v415
        %v821 = vpop.f32.mrf.mxu0
        %v822 = vadd.f32 %v384, %v821
        %v823 = vpop.f32.mrf.mxu0
        %v824 = vadd.f32 %v384, %v823
        %825 = vmatprep.mubr.f32.mxu0 0.0
        %826 = vmatmul.mubr.f32.gmra.mxu0 %v418
        %v827 = vpop.f32.mrf.mxu0
        %v828 = vadd.f32 %v389, %v827
        %v829 = vpop.f32.mrf.mxu0
        %v830 = vadd.f32 %v389, %v829
        %831 = vmatprep.mubr.f32.mxu0 0.0
        %832 = vmatmul.mubr.f32.gmra.mxu0 %v421
        %v833 = vpop.f32.mrf.mxu0
        %v834 = vadd.f32 %v394, %v833
        %v835 = vpop.f32.mrf.mxu0
        %v836 = vadd.f32 %v394, %v835
        %837 = vmatprep.mubr.f32.mxu0 0.0
        %838 = vmatmul.mubr.f32.gmra.mxu0 %v424
        %v839 = vpop.f32.mrf.mxu0
        %v840 = vadd.f32 %v399, %v839
        %v841 = vpop.f32.mrf.mxu0
        %v842 = vadd.f32 %v399, %v841
        %843 = vdwg.mxu0
        %v844 = vmax.f32 %v685, 0.0
        %v845 = vmax.f32 %v687, 0.0
        %v846 = vmax.f32 %v798, 0.0
        %v847 = vmax.f32 %v800, 0.0
        %v848 = vmax.f32 %v691, 0.0
        %v849 = vmax.f32 %v693, 0.0
        %v850 = vmax.f32 %v804, 0.0
        %v851 = vmax.f32 %v806, 0.0
        %v852 = vmax.f32 %v697, 0.0
        %v853 = vmax.f32 %v699, 0.0
        %v854 = vmax.f32 %v810, 0.0
        %v855 = vmax.f32 %v812, 0.0
        %v856 = vmax.f32 %v703, 0.0
        %v857 = vmax.f32 %v705, 0.0
        %v858 = vmax.f32 %v816, 0.0
        %v859 = vmax.f32 %v818, 0.0
        %v860 = vmax.f32 %v709, 0.0
        %v861 = vmax.f32 %v711, 0.0
        %v862 = vmax.f32 %v822, 0.0
        %v863 = vmax.f32 %v824, 0.0
        %v864 = vmax.f32 %v715, 0.0
        %v865 = vmax.f32 %v717, 0.0
        %v866 = vmax.f32 %v828, 0.0
        %v867 = vmax.f32 %v830, 0.0
        %v868 = vmax.f32 %v721, 0.0
        %v869 = vmax.f32 %v723, 0.0
        %v870 = vmax.f32 %v834, 0.0
        %v871 = vmax.f32 %v836, 0.0
        %v872 = vmax.f32 %v727, 0.0
        %v873 = vmax.f32 %v729, 0.0
        %v874 = vmax.f32 %v840, 0.0
        %v875 = vmax.f32 %v842, 0.0
        %v876 = vld [vmem:[%s3] sm:$0xff]
        %v877 = vld [vmem:[%s3 + $0x8] sm:$0xff]
        %v878 = vld [vmem:[%s3 + $0x10] sm:$0xff]
        %v879 = vld [vmem:[%s3 + $0x18] sm:$0xff]
        %v880 = vld [vmem:[%s3 + $0x20] sm:$0xff]
        %v881 = vld [vmem:[%s3 + $0x28] sm:$0xff]
        %v882 = vld [vmem:[%s3 + $0x30] sm:$0xff]
        %v883 = vld [vmem:[%s3 + $0x38] sm:$0xff]
        %v884 = vld [vmem:[%s4] sm:$0xff]
        %v885 = vld [vmem:[%s4 + $0x8] sm:$0xff]
        %v886 = vld [vmem:[%s4 + $0x10] sm:$0xff]
        %v887 = vld [vmem:[%s4 + $0x18] sm:$0xff]
        %v888 = vld [vmem:[%s4 + $0x20] sm:$0xff]
        %v889 = vld [vmem:[%s4 + $0x28] sm:$0xff]
        %v890 = vld [vmem:[%s4 + $0x30] sm:$0xff]
        %v891 = vld [vmem:[%s4 + $0x38] sm:$0xff]
        %893 = vset.pattern.permute.xlu0 0
        %894 = vperm.xlu0 %893, %v884
        %v895 = vpop.permute.xlu0 %894
        %898 = vset.pattern.permute.xlu0 0
        %899 = vperm.xlu0 %898, %v885
        %v900 = vpop.permute.xlu0 %899
        %903 = vset.pattern.permute.xlu0 0
        %904 = vperm.xlu0 %903, %v886
        %v905 = vpop.permute.xlu0 %904
        %908 = vset.pattern.permute.xlu0 0
        %909 = vperm.xlu0 %908, %v887
        %v910 = vpop.permute.xlu0 %909
        %913 = vset.pattern.permute.xlu0 0
        %914 = vperm.xlu0 %913, %v888
        %v915 = vpop.permute.xlu0 %914
        %918 = vset.pattern.permute.xlu0 0
        %919 = vperm.xlu0 %918, %v889
        %v920 = vpop.permute.xlu0 %919
        %923 = vset.pattern.permute.xlu0 0
        %924 = vperm.xlu0 %923, %v890
        %v925 = vpop.permute.xlu0 %924
        %928 = vset.pattern.permute.xlu0 0
        %929 = vperm.xlu0 %928, %v891
        %v930 = vpop.permute.xlu0 %929
        %vm932 = vcmask 523264
        %v934 = vsel %vm932, %v876, 0
        %v937 = vsel %vm932, %v877, 0
        %v940 = vsel %vm932, %v878, 0
        %v943 = vsel %vm932, %v879, 0
        %v946 = vsel %vm932, %v880, 0
        %v949 = vsel %vm932, %v881, 0
        %v952 = vsel %vm932, %v882, 0
        %v955 = vsel %vm932, %v883, 0
        %957 = vmatprep.subr.mxu0 0.0
        %958 = vmatpush1.msra.mxu0 0.0
        %959 = vmatprep.subr.mxu0 0.0
        %960 = vmatpush1.msra.mxu0 0.0
        %961 = vmatprep.subr.mxu0 0.0
        %962 = vmatpush1.msra.mxu0 0.0
        %963 = vmatprep.subr.mxu0 0.0
        %964 = vmatpush1.msra.mxu0 0.0
        %965 = vmatprep.subr.mxu0 0.0
        %966 = vmatpush1.msra.mxu0 0.0
        %967 = vmatprep.subr.mxu0 0.0
        %968 = vmatpush1.msra.mxu0 0.0
        %969 = vmatprep.subr.mxu0 0.0
        %970 = vmatpush1.msra.mxu0 0.0
        %971 = vmatprep.subr.mxu0 0.0
        %972 = vmatpush1.msra.mxu0 0.0
        %973 = vmatprep.subr.mxu0 %v873
        %974 = vmatpush1.msra.mxu0 %v872
        %975 = vmatprep.subr.mxu0 %v869
        %976 = vmatpush1.msra.mxu0 %v868
        %977 = vmatprep.subr.mxu0 %v865
        %978 = vmatpush1.msra.mxu0 %v864
        %979 = vmatprep.subr.mxu0 %v861
        %980 = vmatpush1.msra.mxu0 %v860
        %981 = vmatprep.subr.mxu0 %v857
        %982 = vmatpush1.msra.mxu0 %v856
        %983 = vmatprep.subr.mxu0 %v853
        %984 = vmatpush1.msra.mxu0 %v852
        %985 = vmatprep.subr.mxu0 %v849
        %986 = vmatpush1.msra.mxu0 %v848
        %987 = vmatprep.subr.mxu0 %v845
        %988 = vmatpush1.msra.mxu0 %v844
        %989 = vmatprep.subr.mxu0 0.0
        %990 = vmatpush2.msra.mxu0 0.0
        %991 = vmatprep.subr.mxu0 0.0
        %992 = vmatpush2.msra.mxu0 0.0
        %993 = vmatprep.subr.mxu0 0.0
        %994 = vmatpush2.msra.mxu0 0.0
        %995 = vmatprep.subr.mxu0 0.0
        %996 = vmatpush2.msra.mxu0 0.0
        %997 = vmatprep.subr.mxu0 0.0
        %998 = vmatpush2.msra.mxu0 0.0
        %999 = vmatprep.subr.mxu0 0.0
        %1000 = vmatpush2.msra.mxu0 0.0
        %1001 = vmatprep.subr.mxu0 0.0
        %1002 = vmatpush2.msra.mxu0 0.0
        %1003 = vmatprep.subr.mxu0 0.0
        %1004 = vmatpush2.msra.mxu0 0.0
        %1005 = vmatprep.subr.mxu0 0.0
        %1006 = vmatpush2.msra.mxu0 0.0
        %1007 = vmatprep.subr.mxu0 0.0
        %1008 = vmatpush2.msra.mxu0 0.0
        %1009 = vmatprep.subr.mxu0 0.0
        %1010 = vmatpush2.msra.mxu0 0.0
        %1011 = vmatprep.subr.mxu0 0.0
        %1012 = vmatpush2.msra.mxu0 0.0
        %1013 = vmatprep.subr.mxu0 0.0
        %1014 = vmatpush2.msra.mxu0 0.0
        %1015 = vmatprep.subr.mxu0 0.0
        %1016 = vmatpush2.msra.mxu0 0.0
        %1017 = vmatprep.subr.mxu0 0.0
        %1018 = vmatpush2.msra.mxu0 0.0
        %1019 = vmatprep.subr.mxu0 0.0
        %1020 = vmatpush2.msra.mxu0 0.0
        %1021 = vmatprep.mubr.f32.mxu0 0.0
        %1022 = vmatmul.mubr.f32.gmra.mxu0 %v934
        %v1023 = vpop.f32.mrf.mxu0
        %v1024 = vadd.f32 %v895, %v1023
        %v1025 = vpop.f32.mrf.mxu0
        %v1026 = vadd.f32 %v895, %v1025
        %1027 = vmatprep.mubr.f32.mxu0 0.0
        %1028 = vmatmul.mubr.f32.gmra.mxu0 %v937
        %v1029 = vpop.f32.mrf.mxu0
        %v1030 = vadd.f32 %v900, %v1029
        %v1031 = vpop.f32.mrf.mxu0
        %v1032 = vadd.f32 %v900, %v1031
        %1033 = vmatprep.mubr.f32.mxu0 0.0
        %1034 = vmatmul.mubr.f32.gmra.mxu0 %v940
        %v1035 = vpop.f32.mrf.mxu0
        %v1036 = vadd.f32 %v905, %v1035
        %v1037 = vpop.f32.mrf.mxu0
        %v1038 = vadd.f32 %v905, %v1037
        %1039 = vmatprep.mubr.f32.mxu0 0.0
        %1040 = vmatmul.mubr.f32.gmra.mxu0 %v943
        %v1041 = vpop.f32.mrf.mxu0
        %v1042 = vadd.f32 %v910, %v1041
        %v1043 = vpop.f32.mrf.mxu0
        %v1044 = vadd.f32 %v910, %v1043
        %1045 = vmatprep.mubr.f32.mxu0 0.0
        %1046 = vmatmul.mubr.f32.gmra.mxu0 %v946
        %v1047 = vpop.f32.mrf.mxu0
        %v1048 = vadd.f32 %v915, %v1047
        %v1049 = vpop.f32.mrf.mxu0
        %v1050 = vadd.f32 %v915, %v1049
        %1051 = vmatprep.mubr.f32.mxu0 0.0
        %1052 = vmatmul.mubr.f32.gmra.mxu0 %v949
        %v1053 = vpop.f32.mrf.mxu0
        %v1054 = vadd.f32 %v920, %v1053
        %v1055 = vpop.f32.mrf.mxu0
        %v1056 = vadd.f32 %v920, %v1055
        %1057 = vmatprep.mubr.f32.mxu0 0.0
        %1058 = vmatmul.mubr.f32.gmra.mxu0 %v952
        %v1059 = vpop.f32.mrf.mxu0
        %v1060 = vadd.f32 %v925, %v1059
        %v1061 = vpop.f32.mrf.mxu0
        %v1062 = vadd.f32 %v925, %v1061
        %1063 = vmatprep.mubr.f32.mxu0 0.0
        %1064 = vmatmul.mubr.f32.gmra.mxu0 %v955
        %v1065 = vpop.f32.mrf.mxu0
        %v1066 = vadd.f32 %v930, %v1065
        %v1067 = vpop.f32.mrf.mxu0
        %v1068 = vadd.f32 %v930, %v1067
        %1069 = vdwg.mxu0
        %1070 = vmatprep.subr.mxu0 0.0
        %1071 = vmatpush1.msra.mxu0 0.0
        %1072 = vmatprep.subr.mxu0 0.0
        %1073 = vmatpush1.msra.mxu0 0.0
        %1074 = vmatprep.subr.mxu0 0.0
        %1075 = vmatpush1.msra.mxu0 0.0
        %1076 = vmatprep.subr.mxu0 0.0
        %1077 = vmatpush1.msra.mxu0 0.0
        %1078 = vmatprep.subr.mxu0 0.0
        %1079 = vmatpush1.msra.mxu0 0.0
        %1080 = vmatprep.subr.mxu0 0.0
        %1081 = vmatpush1.msra.mxu0 0.0
        %1082 = vmatprep.subr.mxu0 0.0
        %1083 = vmatpush1.msra.mxu0 0.0
        %1084 = vmatprep.subr.mxu0 0.0
        %1085 = vmatpush1.msra.mxu0 0.0
        %1086 = vmatprep.subr.mxu0 %v875
        %1087 = vmatpush1.msra.mxu0 %v874
        %1088 = vmatprep.subr.mxu0 %v871
        %1089 = vmatpush1.msra.mxu0 %v870
        %1090 = vmatprep.subr.mxu0 %v867
        %1091 = vmatpush1.msra.mxu0 %v866
        %1092 = vmatprep.subr.mxu0 %v863
        %1093 = vmatpush1.msra.mxu0 %v862
        %1094 = vmatprep.subr.mxu0 %v859
        %1095 = vmatpush1.msra.mxu0 %v858
        %1096 = vmatprep.subr.mxu0 %v855
        %1097 = vmatpush1.msra.mxu0 %v854
        %1098 = vmatprep.subr.mxu0 %v851
        %1099 = vmatpush1.msra.mxu0 %v850
        %1100 = vmatprep.subr.mxu0 %v847
        %1101 = vmatpush1.msra.mxu0 %v846
        %1102 = vmatprep.subr.mxu0 0.0
        %1103 = vmatpush2.msra.mxu0 0.0
        %1104 = vmatprep.subr.mxu0 0.0
        %1105 = vmatpush2.msra.mxu0 0.0
        %1106 = vmatprep.subr.mxu0 0.0
        %1107 = vmatpush2.msra.mxu0 0.0
        %1108 = vmatprep.subr.mxu0 0.0
        %1109 = vmatpush2.msra.mxu0 0.0
        %1110 = vmatprep.subr.mxu0 0.0
        %1111 = vmatpush2.msra.mxu0 0.0
        %1112 = vmatprep.subr.mxu0 0.0
        %1113 = vmatpush2.msra.mxu0 0.0
        %1114 = vmatprep.subr.mxu0 0.0
        %1115 = vmatpush2.msra.mxu0 0.0
        %1116 = vmatprep.subr.mxu0 0.0
        %1117 = vmatpush2.msra.mxu0 0.0
        %1118 = vmatprep.subr.mxu0 0.0
        %1119 = vmatpush2.msra.mxu0 0.0
        %1120 = vmatprep.subr.mxu0 0.0
        %1121 = vmatpush2.msra.mxu0 0.0
        %1122 = vmatprep.subr.mxu0 0.0
        %1123 = vmatpush2.msra.mxu0 0.0
        %1124 = vmatprep.subr.mxu0 0.0
        %1125 = vmatpush2.msra.mxu0 0.0
        %1126 = vmatprep.subr.mxu0 0.0
        %1127 = vmatpush2.msra.mxu0 0.0
        %1128 = vmatprep.subr.mxu0 0.0
        %1129 = vmatpush2.msra.mxu0 0.0
        %1130 = vmatprep.subr.mxu0 0.0
        %1131 = vmatpush2.msra.mxu0 0.0
        %1132 = vmatprep.subr.mxu0 0.0
        %1133 = vmatpush2.msra.mxu0 0.0
        %1134 = vmatprep.mubr.f32.mxu0 0.0
        %1135 = vmatmul.mubr.f32.gmra.mxu0 %v934
        %v1136 = vpop.f32.mrf.mxu0
        %v1137 = vadd.f32 %v895, %v1136
        %v1138 = vpop.f32.mrf.mxu0
        %v1139 = vadd.f32 %v895, %v1138
        %1140 = vmatprep.mubr.f32.mxu0 0.0
        %1141 = vmatmul.mubr.f32.gmra.mxu0 %v937
        %v1142 = vpop.f32.mrf.mxu0
        %v1143 = vadd.f32 %v900, %v1142
        %v1144 = vpop.f32.mrf.mxu0
        %v1145 = vadd.f32 %v900, %v1144
        %1146 = vmatprep.mubr.f32.mxu0 0.0
        %1147 = vmatmul.mubr.f32.gmra.mxu0 %v940
        %v1148 = vpop.f32.mrf.mxu0
        %v1149 = vadd.f32 %v905, %v1148
        %v1150 = vpop.f32.mrf.mxu0
        %v1151 = vadd.f32 %v905, %v1150
        %1152 = vmatprep.mubr.f32.mxu0 0.0
        %1153 = vmatmul.mubr.f32.gmra.mxu0 %v943
        %v1154 = vpop.f32.mrf.mxu0
        %v1155 = vadd.f32 %v910, %v1154
        %v1156 = vpop.f32.mrf.mxu0
        %v1157 = vadd.f32 %v910, %v1156
        %1158 = vmatprep.mubr.f32.mxu0 0.0
        %1159 = vmatmul.mubr.f32.gmra.mxu0 %v946
        %v1160 = vpop.f32.mrf.mxu0
        %v1161 = vadd.f32 %v915, %v1160
        %v1162 = vpop.f32.mrf.mxu0
        %v1163 = vadd.f32 %v915, %v1162
        %1164 = vmatprep.mubr.f32.mxu0 0.0
        %1165 = vmatmul.mubr.f32.gmra.mxu0 %v949
        %v1166 = vpop.f32.mrf.mxu0
        %v1167 = vadd.f32 %v920, %v1166
        %v1168 = vpop.f32.mrf.mxu0
        %v1169 = vadd.f32 %v920, %v1168
        %1170 = vmatprep.mubr.f32.mxu0 0.0
        %1171 = vmatmul.mubr.f32.gmra.mxu0 %v952
        %v1172 = vpop.f32.mrf.mxu0
        %v1173 = vadd.f32 %v925, %v1172
        %v1174 = vpop.f32.mrf.mxu0
        %v1175 = vadd.f32 %v925, %v1174
        %1176 = vmatprep.mubr.f32.mxu0 0.0
        %1177 = vmatmul.mubr.f32.gmra.mxu0 %v955
        %v1178 = vpop.f32.mrf.mxu0
        %v1179 = vadd.f32 %v930, %v1178
        %v1180 = vpop.f32.mrf.mxu0
        %v1181 = vadd.f32 %v930, %v1180
        %1182 = vdwg.mxu0
        %v1183 = vmax.f32 %v1024, 0.0
        %v1184 = vmax.f32 %v1026, 0.0
        %v1185 = vmax.f32 %v1137, 0.0
        %v1186 = vmax.f32 %v1139, 0.0
        %v1187 = vmax.f32 %v1030, 0.0
        %v1188 = vmax.f32 %v1032, 0.0
        %v1189 = vmax.f32 %v1143, 0.0
        %v1190 = vmax.f32 %v1145, 0.0
        %v1191 = vmax.f32 %v1036, 0.0
        %v1192 = vmax.f32 %v1038, 0.0
        %v1193 = vmax.f32 %v1149, 0.0
        %v1194 = vmax.f32 %v1151, 0.0
        %v1195 = vmax.f32 %v1042, 0.0
        %v1196 = vmax.f32 %v1044, 0.0
        %v1197 = vmax.f32 %v1155, 0.0
        %v1198 = vmax.f32 %v1157, 0.0
        %v1199 = vmax.f32 %v1048, 0.0
        %v1200 = vmax.f32 %v1050, 0.0
        %v1201 = vmax.f32 %v1161, 0.0
        %v1202 = vmax.f32 %v1163, 0.0
        %v1203 = vmax.f32 %v1054, 0.0
        %v1204 = vmax.f32 %v1056, 0.0
        %v1205 = vmax.f32 %v1167, 0.0
        %v1206 = vmax.f32 %v1169, 0.0
        %v1207 = vmax.f32 %v1060, 0.0
        %v1208 = vmax.f32 %v1062, 0.0
        %v1209 = vmax.f32 %v1173, 0.0
        %v1210 = vmax.f32 %v1175, 0.0
        %v1211 = vmax.f32 %v1066, 0.0
        %v1212 = vmax.f32 %v1068, 0.0
        %v1213 = vmax.f32 %v1179, 0.0
        %v1214 = vmax.f32 %v1181, 0.0
        %v1215 = vld [vmem:[%s5] sm:$0xff]
        %v1216 = vld [vmem:[%s5 + $0x8] sm:$0xff]
        %v1217 = vld [vmem:[%s5 + $0x10] sm:$0xff]
        %v1218 = vld [vmem:[%s5 + $0x18] sm:$0xff]
        %v1219 = vld [vmem:[%s5 + $0x20] sm:$0xff]
        %v1220 = vld [vmem:[%s5 + $0x28] sm:$0xff]
        %v1221 = vld [vmem:[%s5 + $0x30] sm:$0xff]
        %v1222 = vld [vmem:[%s5 + $0x38] sm:$0xff]
        %1224 = vset.pattern.permute.xlu0 0
        %1225 = vperm.xlu0 %1224, %v1215
        %v1226 = vpop.permute.xlu0 %1225
        %1229 = vset.pattern.permute.xlu0 0
        %1230 = vperm.xlu0 %1229, %v1216
        %v1231 = vpop.permute.xlu0 %1230
        %1234 = vset.pattern.permute.xlu0 0
        %1235 = vperm.xlu0 %1234, %v1217
        %v1236 = vpop.permute.xlu0 %1235
        %1239 = vset.pattern.permute.xlu0 0
        %1240 = vperm.xlu0 %1239, %v1218
        %v1241 = vpop.permute.xlu0 %1240
        %1244 = vset.pattern.permute.xlu0 0
        %1245 = vperm.xlu0 %1244, %v1219
        %v1246 = vpop.permute.xlu0 %1245
        %1249 = vset.pattern.permute.xlu0 0
        %1250 = vperm.xlu0 %1249, %v1220
        %v1251 = vpop.permute.xlu0 %1250
        %1254 = vset.pattern.permute.xlu0 0
        %1255 = vperm.xlu0 %1254, %v1221
        %v1256 = vpop.permute.xlu0 %1255
        %1259 = vset.pattern.permute.xlu0 0
        %1260 = vperm.xlu0 %1259, %v1222
        %v1261 = vpop.permute.xlu0 %1260
        %v1263 = vmul.f32 %v1183, %v1226
        %v1264 = vmul.f32 %v1184, %v1226
        %v1265 = vmul.f32 %v1185, %v1226
        %v1266 = vmul.f32 %v1186, %v1226
        %v1267 = vmul.f32 %v1187, %v1231
        %v1268 = vmul.f32 %v1188, %v1231
        %v1269 = vmul.f32 %v1189, %v1231
        %v1270 = vmul.f32 %v1190, %v1231
        %v1271 = vmul.f32 %v1191, %v1236
        %v1272 = vmul.f32 %v1192, %v1236
        %v1273 = vmul.f32 %v1193, %v1236
        %v1274 = vmul.f32 %v1194, %v1236
        %v1275 = vmul.f32 %v1195, %v1241
        %v1276 = vmul.f32 %v1196, %v1241
        %v1277 = vmul.f32 %v1197, %v1241
        %v1278 = vmul.f32 %v1198, %v1241
        %v1279 = vmul.f32 %v1199, %v1246
        %v1280 = vmul.f32 %v1200, %v1246
        %v1281 = vmul.f32 %v1201, %v1246
        %v1282 = vmul.f32 %v1202, %v1246
        %v1283 = vmul.f32 %v1203, %v1251
        %v1284 = vmul.f32 %v1204, %v1251
        %v1285 = vmul.f32 %v1205, %v1251
        %v1286 = vmul.f32 %v1206, %v1251
        %v1287 = vmul.f32 %v1207, %v1256
        %v1288 = vmul.f32 %v1208, %v1256
        %v1289 = vmul.f32 %v1209, %v1256
        %v1290 = vmul.f32 %v1210, %v1256
        %v1291 = vmul.f32 %v1211, %v1261
        %v1292 = vmul.f32 %v1212, %v1261
        %v1293 = vmul.f32 %v1213, %v1261
        %v1294 = vmul.f32 %v1214, %v1261
        %v1295 = vadd.f32 %v1263, %v1267
        %v1296 = vadd.f32 %v1295, %v1271
        %v1297 = vadd.f32 %v1296, %v1275
        %v1298 = vadd.f32 %v1297, %v1279
        %v1299 = vadd.f32 %v1298, %v1283
        %v1300 = vadd.f32 %v1299, %v1287
        %v1301 = vadd.f32 %v1300, %v1291
        %v1302 = vrot.slane %v1301, 4
        %v1303 = vadd.f32 %v1301, %v1302
        %v1304 = vrot.slane %v1303, 2
        %v1305 = vadd.f32 %v1303, %v1304
        %v1306 = vrot.slane %v1305, 1
        %v1307 = vadd.f32 %v1305, %v1306
        %v1308 = vadd.f32 %v1264, %v1268
        %v1309 = vadd.f32 %v1308, %v1272
        %v1310 = vadd.f32 %v1309, %v1276
        %v1311 = vadd.f32 %v1310, %v1280
        %v1312 = vadd.f32 %v1311, %v1284
        %v1313 = vadd.f32 %v1312, %v1288
        %v1314 = vadd.f32 %v1313, %v1292
        %v1315 = vrot.slane %v1314, 4
        %v1316 = vadd.f32 %v1314, %v1315
        %v1317 = vrot.slane %v1316, 2
        %v1318 = vadd.f32 %v1316, %v1317
        %v1319 = vrot.slane %v1318, 1
        %v1320 = vadd.f32 %v1318, %v1319
        %v1321 = vadd.f32 %v1265, %v1269
        %v1322 = vadd.f32 %v1321, %v1273
        %v1323 = vadd.f32 %v1322, %v1277
        %v1324 = vadd.f32 %v1323, %v1281
        %v1325 = vadd.f32 %v1324, %v1285
        %v1326 = vadd.f32 %v1325, %v1289
        %v1327 = vadd.f32 %v1326, %v1293
        %v1328 = vrot.slane %v1327, 4
        %v1329 = vadd.f32 %v1327, %v1328
        %v1330 = vrot.slane %v1329, 2
        %v1331 = vadd.f32 %v1329, %v1330
        %v1332 = vrot.slane %v1331, 1
        %v1333 = vadd.f32 %v1331, %v1332
        %v1334 = vadd.f32 %v1266, %v1270
        %v1335 = vadd.f32 %v1334, %v1274
        %v1336 = vadd.f32 %v1335, %v1278
        %v1337 = vadd.f32 %v1336, %v1282
        %v1338 = vadd.f32 %v1337, %v1286
        %v1339 = vadd.f32 %v1338, %v1290
        %v1340 = vadd.f32 %v1339, %v1294
        %v1341 = vrot.slane %v1340, 4
        %v1342 = vadd.f32 %v1340, %v1341
        %v1343 = vrot.slane %v1342, 2
        %v1344 = vadd.f32 %v1342, %v1343
        %v1345 = vrot.slane %v1344, 1
        %v1346 = vadd.f32 %v1344, %v1345
        %s1347 = sld [smem:[#allocation2]]
        %v1348 = vstv %s1347
        %v1349 = vadd.f32 %v1307, %v1348
        %v1350 = vadd.f32 %v1320, %v1348
        %v1351 = vadd.f32 %v1333, %v1348
        %v1352 = vadd.f32 %v1346, %v1348
        %v1353 = vxor.u32 %v1349, 2147483648
        %v1354 = vxor.u32 %v1350, 2147483648
        %v1355 = vxor.u32 %v1351, 2147483648
        %v1356 = vxor.u32 %v1352, 2147483648
        %v1357 = vmul.f32 %v1353, 1.442695
        %v1358 = vpow.pop %v1357
        %v1359 = vmul.f32 %v1354, 1.442695
        %v1360 = vpow.pop %v1359
        %v1361 = vmul.f32 %v1355, 1.442695
        %v1362 = vpow.pop %v1361
        %v1363 = vmul.f32 %v1356, 1.442695
        %v1364 = vpow.pop %v1363
        %v1365 = vadd.f32 %v1358, 1.0
        %v1366 = vadd.f32 %v1360, 1.0
        %v1367 = vadd.f32 %v1362, 1.0
        %v1368 = vadd.f32 %v1364, 1.0
        %v1369 = vrcp.pop %v1365
        %v1370 = vmul.f32 1.0, %v1369
        %v1371 = vrcp.pop %v1366
        %v1372 = vmul.f32 1.0, %v1371
        %v1373 = vrcp.pop %v1367
        %v1374 = vmul.f32 1.0, %v1373
        %v1375 = vrcp.pop %v1368
        %v1376 = vmul.f32 1.0, %v1375
        %v1381 = vcombine.low %v1370, %v1372
        %v1382 = vcombine.low %v1374, %v1376
        %v1384 = vunpack.c.l.s4 1966171168
        %v1385 = vunpack.c.0.s8 %v1384
        %v1386 = vlaneseq
        %v1387 = vshrl.u32 %v1386, 7
        %v1388 = vsub.s32 %v1385, %v1387
        %v1389 = vrot.slane %v1381, %v1388
        %v1391 = vunpack.c.l.s4 1966171168
        %v1392 = vunpack.c.0.s8 %v1391
        %v1393 = vlaneseq
        %v1394 = vshrl.u32 %v1393, 7
        %v1395 = vsub.s32 %v1392, %v1394
        %v1396 = vrot.slane %v1382, %v1395
        %v1397 = vcombine.low %v1389, %v1396
        %v1399 = vunpack.c.l.s4 1966171168
        %v1400 = vunpack.c.0.s8 %v1399
        %v1401 = vlaneseq
        %v1402 = vshrl.u32 %v1401, 7
        %v1403 = vsub.s32 %v1400, %v1402
        %v1404 = vrot.slane %v1397, %v1403
        %v1406 = vlaneseq
        %vm1407 = vcmp.ge.s32.totalorder %v1406, 0
        %vm1408 = vcmp.lt.s32.totalorder %v1406, 512
        %vm1409 = vmand %vm1407, %vm1408
        %1410 = vst.msk [vmem:[%s273] sm:$0xf] %vm1409, %v1404
        %s1411 = sand.u32 %s182, 1
        %s1412 = scalar_lea.sflag [#allocation4], %s1411
        %s1413 = sand.u32 %s182, 1
        %s1414 = smul.addr %s1413, 4
        %s1415 = scalar_lea.vmem [#allocation3], %s1414
        // Predicated region
        $region49: #{tpu_custom_call.1} parent=47 // pred_check
          %p1416 = pneg %p192
        $region50: #{tpu_custom_call.1} parent=47 // pred_check_branch
          %1418 = sbr.rel (%p1416) target = $region52
        $region51: #{tpu_custom_call.1} parent=47 // pred_region
          %s1419 = smul.u32 4, %s22
          %s1421 = ssub.s32 64, 64
          %1422 = vsyncadd %s1412, %s1421
          %s1423 = smul.addr %s1419, 16
          %s1424 = scalar_lea.hbm %s7, %s1423
          %s1426 = sshll.u32 %s1415, 4
          %s1427 = int_to_ptr.vmem [resolvable:$true] %s1426
          %1429 = dma.vmem_to_hbm [thread:$0]  %s1427, 64, %s1424, %s1412
        $region52: #{tpu_custom_call.1} parent=47 // pred_fallthru
          _
      $region48: #{tpu_custom_call.1} parent=5 // pred_fallthru
        _
      %p1430 = scmp.le.s32.totalorder 2, %s17
      // Predicated region
      $region53: #{tpu_custom_call.1} parent=5 // pred_check
        %p1431 = pneg %p1430
      $region54: #{tpu_custom_call.1} parent=5 // pred_check_branch
        %1433 = sbr.rel (%p1431) target = $region56
      $region55: #{tpu_custom_call.1} parent=5 // pred_region
        %s1434 = ssub.s32 %s17, 2
        // Predicated region
        $region57: #{tpu_custom_call.1} parent=55 // pred_check
          %p1435 = pneg %p198
        $region58: #{tpu_custom_call.1} parent=55 // pred_check_branch
          %1437 = sbr.rel (%p1435) target = $region60
        $region59: #{tpu_custom_call.1} parent=55 // pred_region
          %s1438 = sand.u32 %s183, 1
          %s1439 = scalar_lea.sflag [#allocation4], %s1438
          %s1440 = sand.u32 %s183, 1
          %s1441 = smul.addr %s1440, 4
          %s1442 = scalar_lea.vmem [#allocation3], %s1441
          %1443 = dma.done %s1439, 64
        $region60: #{tpu_custom_call.1} parent=55 // pred_fallthru
          _
      $region56: #{tpu_custom_call.1} parent=5 // pred_fallthru
        _
    $region6: #{tpu_custom_call.1} parent=1 // loop_footer
      %s21 = sadd.s32 1, %s17
    $region7: #{tpu_custom_call.1} parent=1 // loop_footer_branch
      %16 = sbr.rel target = $region3
    $region8: #{tpu_custom_call.1} parent=1 // loop_exit
      _
    %1444 = vsyncpa [#allocation4], 1
    %s1445 = scalar_lea.sflag [#allocation4], 1
    %1446 = vsyncpa %s1445, 1

</llo_original>
